<compile_context>
chip_gen: v5e
topology: v5e:2x2
jax: 0.10.0
libtpu: 0.0.40
codegen_flags: <defaults>
</compile_context>

<pallas_src>
import jax
import jax.numpy as jnp
from jax import lax
from jax.experimental import pallas as pl
from jax.experimental.pallas import tpu as pltpu


def _make_attn_kernel(*, use_scratch, scale_v, mxu_dtype, num_k_tiles):
    """Build the kernel body.

    use_scratch : accumulate in a separate f32 VMEM scratch (bf16 outputs);
                  otherwise accumulate directly in the resident o_ref block.
    scale_v     : apply the per-key 1/denom to v rows (smaller operand, Lq > Dv)
                  instead of to the (Lq, Tk) weight slab.
    mxu_dtype   : in-kernel cast target for both matmuls (None -> input dtype).
    """

    def kernel(q_ref, k_ref, v_ref, o_ref, *scratch):
        acc_ref = scratch[0] if use_scratch else o_ref
        kj = pl.program_id(1)

        q = q_ref[...]            # (Bb, Lq, Dk)
        k = k_ref[...]            # (Bb, Tk, Dk)
        v = v_ref[...]            # (Bb, Tk, Dv)
        if mxu_dtype is not None:
            # Post-DMA cast: fast MXU path without an extra wrapper-side HBM pass.
            # (For the HBM-traffic win, pass bf16 q/k/v from the producer.)
            q = q.astype(mxu_dtype)
            k = k.astype(mxu_dtype)
            v = v.astype(mxu_dtype)

        # q @ k^T: batched dot_general contracting the last dims (no materialized
        # transpose), f32 accumulation on the MXU.
        # TODO(synk): if the bundle dump shows a vxpose of the k tile here, have the
        # producer supply k pre-transposed as (B, Dk, Lk) and contract (M,K)x(K,N).
        s = lax.dot_general(
            q, k,
            dimension_numbers=(((2,), (2,)), ((0,), (0,))),
            preferred_element_type=jnp.float32)         # (Bb, Lq, Tk) f32

        # nn.Softmax(dim=1): normalize over the *query* axis.  Each (batch, key)
        # column is independent, so key tiles carry no cross-tile softmax state;
        # only the w @ v product accumulates across key tiles.
        s_max = jnp.max(s, axis=1, keepdims=True)        # (Bb, 1, Tk)
        e = jnp.exp(s - s_max)
        denom = jnp.sum(e, axis=1, keepdims=True)        # (Bb, 1, Tk)
        inv = pl.reciprocal(denom, approx=True)          # EUP slot, off the VPU path

        # TODO(synk): nn.Dropout(attention_dropout=0.0) / the `dropout` arg are an
        # identity (p = 0.0); dropout is intentionally not implemented.

        mm_dtype = v.dtype
        if scale_v:
            # Lq > Dv: scale the (Tk, Dv) v tile instead of the (Lq, Tk) weights.
            inv_col = jnp.swapaxes(inv, 1, 2)            # (Bb, Tk, 1)
            lhs = e.astype(mm_dtype)
            rhs = (v * inv_col).astype(mm_dtype)
        else:
            lhs = (e * inv).astype(mm_dtype)             # fuse normalize + cast
            rhs = v

        partial = lax.dot_general(
            lhs, rhs,
            dimension_numbers=(((2,), (1,)), ((0,), (0,))),
            preferred_element_type=jnp.float32)          # (Bb, Lq, Dv) f32

        if num_k_tiles == 1:
            o_ref[...] = partial.astype(o_ref.dtype)
        else:
            @pl.when(kj == 0)
            def _first():                                # write, don't zero + add
                acc_ref[...] = partial.astype(acc_ref.dtype)

            @pl.when(kj > 0)
            def _accum():
                acc_ref[...] += partial.astype(acc_ref.dtype)

            if use_scratch:
                @pl.when(kj == num_k_tiles - 1)
                def _finalize():
                    o_ref[...] = acc_ref[...].astype(o_ref.dtype)

    return kernel


def _pick_key_tile(lk, max_tk):
    """Key-tile size: full Lk if it fits, else a divisor of Lk preferring 256-
    (v6e/v7x MXU), then 128-, then 8-alignment, so the wrapper never pads k/v.
    Padding only as a last resort for awkward Lk."""
    if lk <= max_tk:
        return lk, lk
    for align in (256, 128, 8):
        t = (max_tk // align) * align
        while t >= align:
            if lk % t == 0:
                return t, lk
            t -= align
    t = max(8, (max_tk // 8) * 8)
    return t, pl.cdiv(lk, t) * t                          # padded fallback (rare)


def target_dot_attention(q, k, v, v_mask=None, *, bblk=8, tk=512,
                         mxu_dtype=None, kv_buffers=2):
    """Pallas TPU forward of `target_dot_attention`.

    q: (B, Lq, Dk), k: (B, Lk, Dk), v: (B, Lk, Dv), v_mask: (B, Lk) or None.
    Returns (B, Lq, Dv) in q.dtype.

    Regime note: arithmetic intensity is ~Lq flops/byte, so for small Lq
    (< ~240 on v5e / ~310 on v7x / ~650 on v6e) the kernel is HBM-streaming
    bound — the levers that matter are bf16 K/V from the producer, no padding
    copies, and pipeline depth (kv_buffers); MXU/VPU micro-opts only matter for
    large Lq.  Keep Dk/Dv multiples of 128 for lane-dense loads/stores.

    v_mask is accepted but ignored: the original module's bias is constant along
    the dim=1 softmax axis and cancels exactly, so dropping it is both faster and
    numerically closer to the exact result.

    mxu_dtype: optional in-kernel cast (e.g. jnp.bfloat16) for both matmuls when
    f32 inputs arrive; prefer supplying bf16 q/k/v upstream to also halve HBM
    traffic.  kv_buffers: pipeline depth for the streaming k/v blocks (sweep to 3
    if xprof shows exposed DMA between grid steps; pair with a smaller tk on v7x).
    """
    del v_mask                                            # mathematically inert (see header)

    B, Lq, Dk = q.shape
    Bk, Lk, Dkk = k.shape
    Bv, Lkv, Dv = v.shape
    assert (Bk, Dkk) == (B, Dk) and (Bv, Lkv) == (B, Lk)
    out_dtype = q.dtype

    in_isz = jnp.dtype(q.dtype).itemsize
    out_isz = jnp.dtype(out_dtype).itemsize
    scratch_needed = out_dtype != jnp.float32             # f32 out: accumulate in o_ref

    # ---- device-derived VMEM budget ----------------------------------------
    try:
        vmem_cap = int(pltpu.get_tpu_info().vmem_capacity_bytes)
    except Exception:                                      # unknown: assume smallest (v7x)
        vmem_cap = 64 * 1024 * 1024
    limit_cap = (vmem_cap * 3) // 4                        # ~96 MiB v5e/v6e, ~48 MiB v7x
    budget = (limit_cap * 4) // 5                          # headroom for internal scratch

    # ---- block sizes: divisors of B / Lk, so no wrapper-side jnp.pad copies --
    # Cap bblk at B//2 so the 'parallel' batch axis has >= 2 steps (v7x megacore);
    # v5e/v6e are single-TC so the smaller batch block is essentially free.
    bcap = min(bblk, max(1, B // 2)) if B >= 2 else 1
    bblk_eff, tk_eff, lk_pad = 1, None, None
    for bb in [d for d in range(bcap, 0, -1) if B % d == 0]:
        fixed = (2 * bb * Lq * Dk * in_isz                 # q (double-buffered)
                 + 2 * bb * Lq * Dv * out_isz              # out (double-buffered)
                 + (bb * Lq * Dv * 4 if scratch_needed else 0))
        per_key = (kv_buffers * bb * (Dk + Dv) * in_isz    # streaming k/v buffers
                   + 3 * bb * Lq * 4)                      # s / e / w f32 intermediates
        if fixed >= budget:
            continue
        max_tk = min(tk, (budget - fixed) // per_key)
        if max_tk < 8 and max_tk < Lk:
            continue
        bblk_eff = bb
        tk_eff, lk_pad = _pick_key_tile(Lk, int(max(max_tk, 1)))
        break
    if tk_eff is None:                                     # nothing fit: smallest config,
        bblk_eff = 1                                       # let the raised limit absorb it
        tk_eff, lk_pad = _pick_key_tile(Lk, max(8, min(tk, Lk)))

    nb = B // bblk_eff
    nk = lk_pad // tk_eff
    use_scratch = scratch_needed and nk > 1

    if lk_pad != Lk:
        # Rare fallback for awkward Lk: zero-padded k/v rows contribute exactly
        # zero to the output (their v rows are zero), so correctness is unaffected.
        k = jnp.pad(k, ((0, 0), (0, lk_pad - Lk), (0, 0)))
        v = jnp.pad(v, ((0, 0), (0, lk_pad - Lk), (0, 0)))

    # ---- VMEM estimate (includes f32 softmax intermediates) + compiler params -
    fixed = (2 * bblk_eff * Lq * Dk * in_isz
             + 2 * bblk_eff * Lq * Dv * out_isz
             + (bblk_eff * Lq * Dv * 4 if use_scratch else 0))
    per_key = (kv_buffers * bblk_eff * (Dk + Dv) * in_isz
               + 3 * bblk_eff * Lq * 4)
    est = fixed + per_key * tk_eff

    cp_kwargs = dict(dimension_semantics=("parallel", "arbitrary"))
    if est > 16 * 1024 * 1024:                             # v5e default scoped limit ~16 MiB
        cp_kwargs["vmem_limit_bytes"] = int(
            min(limit_cap, max(est + est // 4, 32 * 1024 * 1024)))

    kv_kwargs = {} if kv_buffers == 2 else {"pipeline_mode": pl.Buffered(kv_buffers)}
    in_specs = [
        pl.BlockSpec((bblk_eff, Lq, Dk), lambda bi, ki: (bi, 0, 0)),
        pl.BlockSpec((bblk_eff, tk_eff, Dk), lambda bi, ki: (bi, ki, 0), **kv_kwargs),
        pl.BlockSpec((bblk_eff, tk_eff, Dv), lambda bi, ki: (bi, ki, 0), **kv_kwargs),
    ]
    out_spec = pl.BlockSpec((bblk_eff, Lq, Dv), lambda bi, ki: (bi, 0, 0))
    scratch_shapes = ([pltpu.VMEM((bblk_eff, Lq, Dv), jnp.float32)]
                      if use_scratch else [])

    mxu_cast = None
    if mxu_dtype is not None and jnp.dtype(mxu_dtype) != q.dtype:
        mxu_cast = jnp.dtype(mxu_dtype)

    kernel = _make_attn_kernel(use_scratch=use_scratch,
                               scale_v=(Lq > Dv),
                               mxu_dtype=mxu_cast,
                               num_k_tiles=nk)

    grid_spec = pltpu.PrefetchScalarGridSpec(
        num_scalar_prefetch=0,
        grid=(nb, nk),                                     # key-reduction axis last
        in_specs=in_specs,
        out_specs=out_spec,
        scratch_shapes=scratch_shapes,
    )

    return pl.pallas_call(
        kernel,
        out_shape=jax.ShapeDtypeStruct((B, Lq, Dv), out_dtype),
        grid_spec=grid_spec,
        compiler_params=pltpu.CompilerParams(**cp_kwargs),
    )(q, k, v)


def _reference(q, k, v):
    # The (1 - mask) * -1e5 bias cancels exactly under the dim=1 softmax, so the
    # mask-free form IS the exact reference for the original module's forward.
    s = jnp.einsum("bqd,bkd->bqk", q, k, preferred_element_type=jnp.float32)
    w = jax.nn.softmax(s, axis=1)                          # dim=1, as nn.Softmax(dim=1)
    o = jnp.einsum("bqk,bkd->bqd", w.astype(v.dtype), v,
                   preferred_element_type=jnp.float32)
    return o.astype(q.dtype)


if __name__ == "__main__":
    key = jax.random.PRNGKey(0)
    kq, kk, kv_, km = jax.random.split(key, 4)

    # Small, TPU-friendly shapes: lane-dense hidden dims (128), B=6 so the batch
    # block (3) gives nb=2 (both v7x TensorCores busy), Lk=256 exercises key
    # tiling (tk=128 -> nk=2) with zero wrapper-side padding.
    B, Lq, Lk, Dk, Dv = 6, 16, 256, 128, 128
    q = jax.random.normal(kq, (B, Lq, Dk), dtype=jnp.float32)
    k = jax.random.normal(kk, (B, Lk, Dk), dtype=jnp.float32)
    v = jax.random.normal(kv_, (B, Lk, Dv), dtype=jnp.float32)
    v_mask = (jax.random.uniform(km, (B, Lk)) > 0.3).astype(jnp.float32)

    ref = _reference(q, k, v)

    # 1) f32, single key tile, accumulate directly in the resident out block.
    out1 = jax.block_until_ready(target_dot_attention(q, k, v))
    assert out1.shape == (B, Lq, Dv)
    assert jnp.allclose(out1, ref, atol=3e-2, rtol=3e-2)

    # 2) f32, tiled keys (nk=2): exercises cross-key-tile accumulation in o_ref.
    out2 = jax.block_until_ready(target_dot_attention(q, k, v, bblk=4, tk=128))
    assert jnp.allclose(out2, ref, atol=3e-2, rtol=3e-2)

    # 3) v_mask accepted (mathematically inert under the dim=1 softmax).
    out3 = jax.block_until_ready(target_dot_attention(q, k, v, v_mask, tk=128))
    assert jnp.allclose(out3, ref, atol=3e-2, rtol=3e-2)

    # 4) bf16 inputs: bf16 MXU matmuls (f32 accumulation) + f32 scratch
    #    accumulator for the bf16 output.
    qb, kb, vb = (x.astype(jnp.bfloat16) for x in (q, k, v))
    out4 = jax.block_until_ready(target_dot_attention(qb, kb, vb, tk=128))
    ref_b = _reference(qb, kb, vb)
    assert out4.dtype == jnp.bfloat16
    assert jnp.allclose(out4.astype(jnp.float32), ref_b.astype(jnp.float32),
                        atol=8e-2, rtol=8e-2)

    print("KERNEL_OK")
</pallas_src>

<mosaic_0001>
module attributes {stable_mosaic.version = 11 : i64} {
  func.func @kernel(%arg0: i32, %arg1: i32, %arg2: memref<3x16x128xf32, #tpu.memory_space<vmem>>, %arg3: memref<3x256x128xf32, #tpu.memory_space<vmem>>, %arg4: memref<3x256x128xf32, #tpu.memory_space<vmem>>, %arg5: memref<3x16x128xf32, #tpu.memory_space<vmem>>) attributes {dimension_semantics = [#tpu.dimension_semantics<parallel>, #tpu.dimension_semantics<arbitrary>], iteration_bounds = array<i64: 2, 1>, scalar_prefetch = 0 : i64, scratch_operands = 0 : i64, tpu.core_type = #tpu.core_type<tc>, window_params = [{transform_indices = @transform_0, window_bounds = array<i64: 3, 16, 128>}, {transform_indices = @transform_1, window_bounds = array<i64: 3, 256, 128>}, {transform_indices = @transform_2, window_bounds = array<i64: 3, 256, 128>}, {transform_indices = @transform_3, window_bounds = array<i64: 3, 16, 128>}]} {
    %c0 = arith.constant 0 : index
    %c0_0 = arith.constant 0 : index
    %c0_1 = arith.constant 0 : index
    %0 = vector.load %arg2[%c0, %c0_0, %c0_1] : memref<3x16x128xf32, #tpu.memory_space<vmem>>, vector<3x16x128xf32>
    %c0_2 = arith.constant 0 : index
    %c0_3 = arith.constant 0 : index
    %c0_4 = arith.constant 0 : index
    %1 = vector.load %arg3[%c0_2, %c0_3, %c0_4] : memref<3x256x128xf32, #tpu.memory_space<vmem>>, vector<3x256x128xf32>
    %c0_5 = arith.constant 0 : index
    %c0_6 = arith.constant 0 : index
    %c0_7 = arith.constant 0 : index
    %2 = vector.load %arg4[%c0_5, %c0_6, %c0_7] : memref<3x256x128xf32, #tpu.memory_space<vmem>>, vector<3x256x128xf32>
    %cst = arith.constant dense<0.000000e+00> : vector<3x16x256xf32>
    %3 = tpu.matmul %0, %1, %cst {dimension_numbers = #tpu.dot_dimension_numbers<[2], [2], [1], [1], [0, 0, 0, 1, 1, 1], [0], [0]>} : vector<3x16x128xf32>, vector<3x256x128xf32>, vector<3x16x256xf32> -> vector<3x16x256xf32>
    %cst_8 = arith.constant dense<0xFF800000> : vector<3x256xf32>
    %4 = vector.multi_reduction <maximumf>, %3, %cst_8 [1] : vector<3x16x256xf32> to vector<3x256xf32>
    %5 = vector.shape_cast %4 : vector<3x256xf32> to vector<3x1x256xf32>
    %6 = vector.broadcast %5 : vector<3x1x256xf32> to vector<3x16x256xf32>
    %7 = arith.subf %3, %6 : vector<3x16x256xf32>
    %8 = math.exp %7 : vector<3x16x256xf32>
    %cst_9 = arith.constant dense<0.000000e+00> : vector<3x256xf32>
    %9 = vector.multi_reduction <add>, %8, %cst_9 [1] : vector<3x16x256xf32> to vector<3x256xf32>
    %10 = vector.shape_cast %9 : vector<3x256xf32> to vector<3x1x256xf32>
    %11 = tpu.reciprocal %10 {approx = true} : vector<3x1x256xf32> -> vector<3x1x256xf32>
    %12 = vector.broadcast %11 : vector<3x1x256xf32> to vector<3x16x256xf32>
    %13 = arith.mulf %8, %12 : vector<3x16x256xf32>
    %cst_10 = arith.constant dense<0.000000e+00> : vector<3x16x128xf32>
    %14 = tpu.matmul %13, %2, %cst_10 {dimension_numbers = #tpu.dot_dimension_numbers<[2], [1], [1], [2], [0, 0, 0, 1, 1, 2], [0], [0]>} : vector<3x16x256xf32>, vector<3x256x128xf32>, vector<3x16x128xf32> -> vector<3x16x128xf32>
    %c0_11 = arith.constant 0 : index
    %c0_12 = arith.constant 0 : index
    %c0_13 = arith.constant 0 : index
    %15 = vector.load %arg5[%c0_11, %c0_12, %c0_13] : memref<3x16x128xf32, #tpu.memory_space<vmem>>, vector<3x16x128xf32>
    tpu.vector_store %arg5[%c0_11, %c0_12, %c0_13], %14 {strides = array<i32>} : memref<3x16x128xf32, #tpu.memory_space<vmem>>, vector<3x16x128xf32>,
    return
  }
  func.func @transform_0(%arg0: i32, %arg1: i32) -> (i32, i32, i32) {
    %c0_i32 = arith.constant 0 : i32
    %c0_i32_0 = arith.constant 0 : i32
    %c0_i32_1 = arith.constant 0 : i32
    return %arg0, %c0_i32, %c0_i32_0 : i32, i32, i32
  }
  func.func @transform_1(%arg0: i32, %arg1: i32) -> (i32, i32, i32) {
    %c0_i32 = arith.constant 0 : i32
    %c0_i32_0 = arith.constant 0 : i32
    return %arg0, %arg1, %c0_i32 : i32, i32, i32
  }
  func.func @transform_2(%arg0: i32, %arg1: i32) -> (i32, i32, i32) {
    %c0_i32 = arith.constant 0 : i32
    %c0_i32_0 = arith.constant 0 : i32
    return %arg0, %arg1, %c0_i32 : i32, i32, i32
  }
  func.func @transform_3(%arg0: i32, %arg1: i32) -> (i32, i32, i32) {
    %c0_i32 = arith.constant 0 : i32
    %c0_i32_0 = arith.constant 0 : i32
    %c0_i32_1 = arith.constant 0 : i32
    return %arg0, %c0_i32, %c0_i32_0 : i32, i32, i32
  }
}

</mosaic_0001>

<llo_original>
// kernel: tpu_custom_call.1
$region0: #{tpu_custom_call.1}
  #allocation0 [shape = 'u32[]', space=smem, size = 0x4, offset = 0x4, fixed_abs, tag = 'smem constant byte address 0x4 - core index']
  #allocation1 [shape = 'u32[72,128]{1,0:T(1,128)}', space=vmem, size = 0x9000, scoped, tag = 'internal scratch']
  %s0 = inlined_call_operand.hbm [shape: f32[6,16,128], index: 0, kind: input, shape index: {}]
  %s1 = inlined_call_operand.hbm [shape: f32[6,256,128], index: 1, kind: input, shape index: {}]
  %s2 = inlined_call_operand.hbm [shape: f32[6,256,128], index: 2, kind: input, shape index: {}]
  %s3 = inlined_call_operand.hbm [shape: f32[6,16,128], index: 3, kind: output, shape index: {}]
  %s4 = sld [smem:[#allocation0]]
  $region57: #{tpu_custom_call.1} parent=0
    _
  %s6 = ssub.s32 1, %s4
  %s7 = scalar_select 0, %s6, %s4
  $region1: #{tpu_custom_call.1} parent=0
    #allocation2 [shape = 'u8[49152]{0}', space=vmem, size = 0xc000, scoped, tag = 'input window, operand 0']
    #allocation3 [shape = 's32[2]{0}', space=sflag, size = 0x8, scoped, tag = 'scoped memory for tpu_custom_call.1']
    #allocation4 [shape = 's32[2]{0}', space=sflag, size = 0x8, scoped, tag = 'scoped memory for tpu_custom_call.1']
    #allocation5 [shape = 'u8[786432]{0}', space=vmem, size = 0xc0000, scoped, tag = 'input window, operand 1']
    #allocation6 [shape = 's32[2]{0}', space=sflag, size = 0x8, scoped, tag = 'scoped memory for tpu_custom_call.1']
    #allocation7 [shape = 'u8[786432]{0}', space=vmem, size = 0xc0000, scoped, tag = 'input window, operand 2']
    #allocation8 [shape = 'u8[49152]{0}', space=vmem, size = 0xc000, scoped, tag = 'output window, operand 0']
    %8 = vsyncpa [#allocation3], 0
    %s9 = scalar_lea.sflag [#allocation3], 1
    %10 = vsyncpa %s9, 0
    %11 = vsyncpa [#allocation6], 0
    %s12 = scalar_lea.sflag [#allocation6], 1
    %13 = vsyncpa %s12, 0
    %14 = vsyncpa [#allocation4], 0
    %s15 = scalar_lea.sflag [#allocation4], 1
    %16 = vsyncpa %s15, 0
    loop: start=0, step=1, limit=4
    $region2: #{tpu_custom_call.1} parent=1 // loop_pre_header
      _
    $region3: #{tpu_custom_call.1} parent=1 // loop_header
      %s18 = sphi 0, %s22
      %p19 = scmp.ge.s32.totalorder %s18, 4
      %s25 = sphi 0, %s37
      %s26 = sphi 0, %s33
      %s27 = sphi 0, %s25
      %s28 = sphi 0, %s26
      %s29 = sphi 0, %s27
      %s30 = sphi 0, %s28
      %s40 = sphi 0, %s42
      %s43 = sphi 0, %s40
      %s44 = sphi 0, %s43
      %s60 = sphi 0, %s44
      %s68 = sphi 0, %s70
      %s71 = sphi 0, %s68
      %s72 = sphi 0, %s71
      %s88 = sphi 0, %s72
      %s96 = sphi 0, %s98
      %s99 = sphi 0, %s96
      %s100 = sphi 0, %s99
      %s116 = sphi 0, %s100
      %s122 = sphi 0, %s124
      %s125 = sphi 0, %s122
      %s126 = sphi 0, %s125
      %s142 = sphi 0, %s126
    $region4: #{tpu_custom_call.1} parent=1 // loop_header_branch
      %21 = sbr.rel (%p19) target = $region8
    $region5: #{tpu_custom_call.1} parent=1 // loop_body
      %s23 = ssub.s32 %s18, 1
      %s24 = ssub.s32 %s18, 2
      %s31 = sadd.s32 1, %s26
      %p32 = scmp.ge.s32.totalorder %s31, 1
      %s33 = scalar_select %p32, 0, %s31
      %s34 = sadd.s32 1, %s25
      %s35 = scalar_select %p32, %s34, %s25
      %p36 = scmp.ge.s32.totalorder %s35, 2
      %s37 = scalar_select %p36, 0, %s35
      %s38 = ssub.s32 %s25, %s37
      %p39 = scmp.eq.s32.totalorder %s38, 0
      %s41 = sadd.s32 %s40, 1
      %s42 = scalar_select %p39, %s40, %s41
      %p45 = pneg %p39
      %p46 = scmp.eq.s32.totalorder %s18, 1
      %p47 = por %p45, %p46
      %p48 = scmp.ne.s32.totalorder %s40, %s43
      %p49 = scmp.eq.s32.totalorder %s18, 0
      %p50 = por %p48, %p49
      %p51 = scmp.ne.s32.totalorder %s40, %s43
      %p52 = scmp.eq.s32.totalorder %s23, 1
      %p53 = por %p51, %p52
      %p54 = scmp.ne.s32.totalorder %s43, %s44
      %p55 = scmp.eq.s32.totalorder %s23, 0
      %p56 = por %p54, %p55
      %p57 = scmp.ne.s32.totalorder %s43, %s44
      %p58 = scmp.eq.s32.totalorder %s24, 1
      %p59 = por %p57, %p58
      %p61 = scmp.ne.s32.totalorder %s44, %s60
      %p62 = scmp.eq.s32.totalorder %s24, 0
      %p63 = por %p61, %p62
      %s64 = ssub.s32 %s25, %s37
      %s65 = ssub.s32 %s26, %s33
      %s66 = sor.u32 %s64, %s65
      %p67 = scmp.eq.s32.totalorder %s66, 0
      %s69 = sadd.s32 %s68, 1
      %s70 = scalar_select %p67, %s68, %s69
      %p73 = pneg %p67
      %p74 = scmp.eq.s32.totalorder %s18, 1
      %p75 = por %p73, %p74
      %p76 = scmp.ne.s32.totalorder %s68, %s71
      %p77 = scmp.eq.s32.totalorder %s18, 0
      %p78 = por %p76, %p77
      %p79 = scmp.ne.s32.totalorder %s68, %s71
      %p80 = scmp.eq.s32.totalorder %s23, 1
      %p81 = por %p79, %p80
      %p82 = scmp.ne.s32.totalorder %s71, %s72
      %p83 = scmp.eq.s32.totalorder %s23, 0
      %p84 = por %p82, %p83
      %p85 = scmp.ne.s32.totalorder %s71, %s72
      %p86 = scmp.eq.s32.totalorder %s24, 1
      %p87 = por %p85, %p86
      %p89 = scmp.ne.s32.totalorder %s72, %s88
      %p90 = scmp.eq.s32.totalorder %s24, 0
      %p91 = por %p89, %p90
      %s92 = ssub.s32 %s25, %s37
      %s93 = ssub.s32 %s26, %s33
      %s94 = sor.u32 %s92, %s93
      %p95 = scmp.eq.s32.totalorder %s94, 0
      %s97 = sadd.s32 %s96, 1
      %s98 = scalar_select %p95, %s96, %s97
      %p101 = pneg %p95
      %p102 = scmp.eq.s32.totalorder %s18, 1
      %p103 = por %p101, %p102
      %p104 = scmp.ne.s32.totalorder %s96, %s99
      %p105 = scmp.eq.s32.totalorder %s18, 0
      %p106 = por %p104, %p105
      %p107 = scmp.ne.s32.totalorder %s96, %s99
      %p108 = scmp.eq.s32.totalorder %s23, 1
      %p109 = por %p107, %p108
      %p110 = scmp.ne.s32.totalorder %s99, %s100
      %p111 = scmp.eq.s32.totalorder %s23, 0
      %p112 = por %p110, %p111
      %p113 = scmp.ne.s32.totalorder %s99, %s100
      %p114 = scmp.eq.s32.totalorder %s24, 1
      %p115 = por %p113, %p114
      %p117 = scmp.ne.s32.totalorder %s100, %s116
      %p118 = scmp.eq.s32.totalorder %s24, 0
      %p119 = por %p117, %p118
      %s120 = ssub.s32 %s25, %s37
      %p121 = scmp.eq.s32.totalorder %s120, 0
      %s123 = sadd.s32 %s122, 1
      %s124 = scalar_select %p121, %s122, %s123
      %p127 = pneg %p121
      %p128 = scmp.eq.s32.totalorder %s18, 1
      %p129 = por %p127, %p128
      %p130 = scmp.ne.s32.totalorder %s122, %s125
      %p131 = scmp.eq.s32.totalorder %s18, 0
      %p132 = por %p130, %p131
      %p133 = scmp.ne.s32.totalorder %s122, %s125
      %p134 = scmp.eq.s32.totalorder %s23, 1
      %p135 = por %p133, %p134
      %p136 = scmp.ne.s32.totalorder %s125, %s126
      %p137 = scmp.eq.s32.totalorder %s23, 0
      %p138 = por %p136, %p137
      %p139 = scmp.ne.s32.totalorder %s125, %s126
      %p140 = scmp.eq.s32.totalorder %s24, 1
      %p141 = por %p139, %p140
      %p143 = scmp.ne.s32.totalorder %s126, %s142
      %p144 = scmp.eq.s32.totalorder %s24, 0
      %p145 = por %p143, %p144
      %p146 = scmp.le.s32.totalorder 1, %s18
      %p147 = scmp.lt.s32.totalorder %s18, 3
      %p148 = pnand %p146, %p147
      %p149 = pneg %p148
      // Predicated region
      $region9: #{tpu_custom_call.1} parent=5 // pred_check
        _
      $region10: #{tpu_custom_call.1} parent=5 // pred_check_branch
        %151 = sbr.rel (%p148) target = $region12
      $region11: #{tpu_custom_call.1} parent=5 // pred_region
        %s152 = ssub.s32 %s18, 1
      $region12: #{tpu_custom_call.1} parent=5 // pred_fallthru
        _
      %p153 = scmp.lt.s32.totalorder %s18, 2
      // Predicated region
      $region13: #{tpu_custom_call.1} parent=5 // pred_check
        %p154 = pneg %p153
      $region14: #{tpu_custom_call.1} parent=5 // pred_check_branch
        %156 = sbr.rel (%p154) target = $region16
      $region15: #{tpu_custom_call.1} parent=5 // pred_region
        // Predicated region
        $region17: #{tpu_custom_call.1} parent=15 // pred_check
          %p157 = pneg %p50
        $region18: #{tpu_custom_call.1} parent=15 // pred_check_branch
          %159 = sbr.rel (%p157) target = $region20
        $region19: #{tpu_custom_call.1} parent=15 // pred_region
          %s160 = sand.u32 %s40, 1
          %s161 = scalar_lea.sflag [#allocation3], %s160
          %s162 = sand.u32 %s40, 1
          %s163 = smul.addr %s162, 48
          %s164 = scalar_lea.vmem [#allocation2], %s163
          %s165 = smul.u32 3, %s25
          %167 = vsyncadd %s161, 0
          %s168 = smul.addr %s165, 2
          %s169 = smul.addr %s168, 8
          %s170 = scalar_lea.hbm %s0, %s169
          %s171 = sshll.u32 %s170, 4
          %s172 = int_to_ptr.hbm [resolvable:$true] %s171
          %s173 = sshll.u32 %s164, 4
          %s174 = int_to_ptr.vmem [resolvable:$true] %s173
          %179 = dma.hbm_to_vmem [thread:$0]  %s172, 768, %s174, %s161, 128, 128, 8
        $region20: #{tpu_custom_call.1} parent=15 // pred_fallthru
          _
        // Predicated region
        $region21: #{tpu_custom_call.1} parent=15 // pred_check
          %p180 = pneg %p78
        $region22: #{tpu_custom_call.1} parent=15 // pred_check_branch
          %182 = sbr.rel (%p180) target = $region24
        $region23: #{tpu_custom_call.1} parent=15 // pred_region
          %s183 = sand.u32 %s18, 1
          %s184 = scalar_lea.sflag [#allocation6], %s183
          %s185 = sand.u32 %s68, 1
          %s186 = smul.addr %s185, 768
          %s187 = scalar_lea.vmem [#allocation5], %s186
          %s188 = smul.u32 3, %s25
          %s189 = smul.u32 32, %s26
          %191 = vsyncadd %s184, 0
          %s192 = smul.addr %s188, 32
          %s193 = sadd.s32 %s189, %s192
          %s194 = smul.addr %s193, 8
          %s195 = scalar_lea.hbm %s1, %s194
          %s196 = sshll.u32 %s195, 4
          %s197 = int_to_ptr.hbm [resolvable:$true] %s196
          %s198 = sshll.u32 %s187, 4
          %s199 = int_to_ptr.vmem [resolvable:$true] %s198
          %204 = dma.hbm_to_vmem [thread:$0]  %s197, 12288, %s199, %s184, 128, 128, 8
        $region24: #{tpu_custom_call.1} parent=15 // pred_fallthru
          _
        // Predicated region
        $region25: #{tpu_custom_call.1} parent=15 // pred_check
          %p205 = pneg %p106
        $region26: #{tpu_custom_call.1} parent=15 // pred_check_branch
          %207 = sbr.rel (%p205) target = $region28
        $region27: #{tpu_custom_call.1} parent=15 // pred_region
          %s208 = sand.u32 %s18, 1
          %s209 = scalar_lea.sflag [#allocation6], %s208
          %s210 = sand.u32 %s96, 1
          %s211 = smul.addr %s210, 768
          %s212 = scalar_lea.vmem [#allocation7], %s211
          %s213 = smul.u32 3, %s25
          %s214 = smul.u32 32, %s26
          %216 = vsyncadd %s209, 0
          %s217 = smul.addr %s213, 32
          %s218 = sadd.s32 %s214, %s217
          %s219 = smul.addr %s218, 8
          %s220 = scalar_lea.hbm %s2, %s219
          %s221 = sshll.u32 %s220, 4
          %s222 = int_to_ptr.hbm [resolvable:$true] %s221
          %s223 = sshll.u32 %s212, 4
          %s224 = int_to_ptr.vmem [resolvable:$true] %s223
          %229 = dma.hbm_to_vmem [thread:$0]  %s222, 12288, %s224, %s209, 128, 128, 8
        $region28: #{tpu_custom_call.1} parent=15 // pred_fallthru
          _
      $region16: #{tpu_custom_call.1} parent=5 // pred_fallthru
        _
      %p230 = scmp.le.s32.totalorder 1, %s18
      %p231 = scmp.lt.s32.totalorder %s18, 3
      %p232 = pnand %p230, %p231
      %p233 = pneg %p232
      // Predicated region
      $region29: #{tpu_custom_call.1} parent=5 // pred_check
        _
      $region30: #{tpu_custom_call.1} parent=5 // pred_check_branch
        %235 = sbr.rel (%p232) target = $region32
      $region31: #{tpu_custom_call.1} parent=5 // pred_region
        %s236 = ssub.s32 %s18, 1
        %s237 = sand.u32 %s43, 1
        %s238 = scalar_lea.sflag [#allocation3], %s237
        %s239 = sand.u32 %s43, 1
        %s240 = smul.addr %s239, 48
        %s241 = scalar_lea.vmem [#allocation2], %s240
        // Predicated region
        $region33: #{tpu_custom_call.1} parent=31 // pred_check
          %p242 = pneg %p56
        $region34: #{tpu_custom_call.1} parent=31 // pred_check_branch
          %244 = sbr.rel (%p242) target = $region36
        $region35: #{tpu_custom_call.1} parent=31 // pred_region
          %246 = dma.done %s238, 768
        $region36: #{tpu_custom_call.1} parent=31 // pred_fallthru
          _
        %s247 = sand.u32 %s23, 1
        %s248 = scalar_lea.sflag [#allocation6], %s247
        %s249 = sand.u32 %s71, 1
        %s250 = smul.addr %s249, 768
        %s251 = scalar_lea.vmem [#allocation5], %s250
        // Predicated region
        $region37: #{tpu_custom_call.1} parent=31 // pred_check
          %p252 = pneg %p84
        $region38: #{tpu_custom_call.1} parent=31 // pred_check_branch
          %254 = sbr.rel (%p252) target = $region40
        $region39: #{tpu_custom_call.1} parent=31 // pred_region
          %256 = dma.done %s248, 12288
        $region40: #{tpu_custom_call.1} parent=31 // pred_fallthru
          _
        %s257 = sand.u32 %s23, 1
        %s258 = scalar_lea.sflag [#allocation6], %s257
        %s259 = sand.u32 %s99, 1
        %s260 = smul.addr %s259, 768
        %s261 = scalar_lea.vmem [#allocation7], %s260
        // Predicated region
        $region41: #{tpu_custom_call.1} parent=31 // pred_check
          %p262 = pneg %p112
        $region42: #{tpu_custom_call.1} parent=31 // pred_check_branch
          %264 = sbr.rel (%p262) target = $region44
        $region43: #{tpu_custom_call.1} parent=31 // pred_region
          %266 = dma.done %s258, 12288
        $region44: #{tpu_custom_call.1} parent=31 // pred_fallthru
          _
        %s267 = sand.u32 %s43, 1
        %s268 = scalar_lea.sflag [#allocation3], %s267
        %s269 = sand.u32 %s43, 1
        %s270 = smul.addr %s269, 48
        %s271 = scalar_lea.vmem [#allocation2], %s270
        %p272 = pneg %p56
        %p273 = pneg %p53
        %s274 = sand.u32 %s23, 1
        %s275 = scalar_lea.sflag [#allocation6], %s274
        %s276 = sand.u32 %s71, 1
        %s277 = smul.addr %s276, 768
        %s278 = scalar_lea.vmem [#allocation5], %s277
        %p279 = pneg %p84
        %p280 = pneg %p81
        %s281 = sand.u32 %s23, 1
        %s282 = scalar_lea.sflag [#allocation6], %s281
        %s283 = sand.u32 %s99, 1
        %s284 = smul.addr %s283, 768
        %s285 = scalar_lea.vmem [#allocation7], %s284
        %p286 = pneg %p112
        %p287 = pneg %p109
        %p288 = pneg %p138
        %p289 = pneg %p135
        %s290 = sand.u32 %s125, 1
        %s291 = scalar_lea.sflag [#allocation4], %s290
        %s292 = sand.u32 %s125, 1
        %s293 = smul.addr %s292, 48
        %s294 = scalar_lea.vmem [#allocation8], %s293
        %s295 = smul.u32 3, %s27
        %s296 = smul.u32 3, %s27
        %s297 = smul.u32 32, %s28
        %s298 = smul.u32 3, %s27
        %s299 = smul.u32 32, %s28
        %s300 = smul.u32 3, %s27
        %v301 = vld [vmem:[%s241] sm:$0xff]
        %v302 = vld [vmem:[%s241 + $0x8] sm:$0xff]
        %v303 = vld [vmem:[%s241 + $0x10] sm:$0xff]
        %v304 = vld [vmem:[%s241 + $0x18] sm:$0xff]
        %v305 = vld [vmem:[%s241 + $0x20] sm:$0xff]
        %v306 = vld [vmem:[%s241 + $0x28] sm:$0xff]
        %v307 = vld [vmem:[%s251] sm:$0xff]
        %v308 = vld [vmem:[%s251 + $0x8] sm:$0xff]
        %v309 = vld [vmem:[%s251 + $0x10] sm:$0xff]
        %v310 = vld [vmem:[%s251 + $0x18] sm:$0xff]
        %v311 = vld [vmem:[%s251 + $0x20] sm:$0xff]
        %v312 = vld [vmem:[%s251 + $0x28] sm:$0xff]
        %v313 = vld [vmem:[%s251 + $0x30] sm:$0xff]
        %v314 = vld [vmem:[%s251 + $0x38] sm:$0xff]
        %v315 = vld [vmem:[%s251 + $0x40] sm:$0xff]
        %v316 = vld [vmem:[%s251 + $0x48] sm:$0xff]
        %v317 = vld [vmem:[%s251 + $0x50] sm:$0xff]
        %v318 = vld [vmem:[%s251 + $0x58] sm:$0xff]
        %v319 = vld [vmem:[%s251 + $0x60] sm:$0xff]
        %v320 = vld [vmem:[%s251 + $0x68] sm:$0xff]
        %v321 = vld [vmem:[%s251 + $0x70] sm:$0xff]
        %v322 = vld [vmem:[%s251 + $0x78] sm:$0xff]
        %v323 = vld [vmem:[%s251 + $0x80] sm:$0xff]
        %v324 = vld [vmem:[%s251 + $0x88] sm:$0xff]
        %v325 = vld [vmem:[%s251 + $0x90] sm:$0xff]
        %v326 = vld [vmem:[%s251 + $0x98] sm:$0xff]
        %v327 = vld [vmem:[%s251 + $0xa0] sm:$0xff]
        %v328 = vld [vmem:[%s251 + $0xa8] sm:$0xff]
        %v329 = vld [vmem:[%s251 + $0xb0] sm:$0xff]
        %v330 = vld [vmem:[%s251 + $0xb8] sm:$0xff]
        %v331 = vld [vmem:[%s251 + $0xc0] sm:$0xff]
        %v332 = vld [vmem:[%s251 + $0xc8] sm:$0xff]
        %v333 = vld [vmem:[%s251 + $0xd0] sm:$0xff]
        %v334 = vld [vmem:[%s251 + $0xd8] sm:$0xff]
        %v335 = vld [vmem:[%s251 + $0xe0] sm:$0xff]
        %v336 = vld [vmem:[%s251 + $0xe8] sm:$0xff]
        %v337 = vld [vmem:[%s251 + $0xf0] sm:$0xff]
        %v338 = vld [vmem:[%s251 + $0xf8] sm:$0xff]
        %v339 = vld [vmem:[%s251 + $0x100] sm:$0xff]
        %v340 = vld [vmem:[%s251 + $0x108] sm:$0xff]
        %v341 = vld [vmem:[%s251 + $0x110] sm:$0xff]
        %v342 = vld [vmem:[%s251 + $0x118] sm:$0xff]
        %v343 = vld [vmem:[%s251 + $0x120] sm:$0xff]
        %v344 = vld [vmem:[%s251 + $0x128] sm:$0xff]
        %v345 = vld [vmem:[%s251 + $0x130] sm:$0xff]
        %v346 = vld [vmem:[%s251 + $0x138] sm:$0xff]
        %v347 = vld [vmem:[%s251 + $0x140] sm:$0xff]
        %v348 = vld [vmem:[%s251 + $0x148] sm:$0xff]
        %v349 = vld [vmem:[%s251 + $0x150] sm:$0xff]
        %v350 = vld [vmem:[%s251 + $0x158] sm:$0xff]
        %v351 = vld [vmem:[%s251 + $0x160] sm:$0xff]
        %v352 = vld [vmem:[%s251 + $0x168] sm:$0xff]
        %v353 = vld [vmem:[%s251 + $0x170] sm:$0xff]
        %v354 = vld [vmem:[%s251 + $0x178] sm:$0xff]
        %v355 = vld [vmem:[%s251 + $0x180] sm:$0xff]
        %v356 = vld [vmem:[%s251 + $0x188] sm:$0xff]
        %v357 = vld [vmem:[%s251 + $0x190] sm:$0xff]
        %v358 = vld [vmem:[%s251 + $0x198] sm:$0xff]
        %v359 = vld [vmem:[%s251 + $0x1a0] sm:$0xff]
        %v360 = vld [vmem:[%s251 + $0x1a8] sm:$0xff]
        %v361 = vld [vmem:[%s251 + $0x1b0] sm:$0xff]
        %v362 = vld [vmem:[%s251 + $0x1b8] sm:$0xff]
        %v363 = vld [vmem:[%s251 + $0x1c0] sm:$0xff]
        %v364 = vld [vmem:[%s251 + $0x1c8] sm:$0xff]
        %v365 = vld [vmem:[%s251 + $0x1d0] sm:$0xff]
        %v366 = vld [vmem:[%s251 + $0x1d8] sm:$0xff]
        %v367 = vld [vmem:[%s251 + $0x1e0] sm:$0xff]
        %v368 = vld [vmem:[%s251 + $0x1e8] sm:$0xff]
        %v369 = vld [vmem:[%s251 + $0x1f0] sm:$0xff]
        %v370 = vld [vmem:[%s251 + $0x1f8] sm:$0xff]
        %v371 = vld [vmem:[%s251 + $0x200] sm:$0xff]
        %v372 = vld [vmem:[%s251 + $0x208] sm:$0xff]
        %v373 = vld [vmem:[%s251 + $0x210] sm:$0xff]
        %v374 = vld [vmem:[%s251 + $0x218] sm:$0xff]
        %v375 = vld [vmem:[%s251 + $0x220] sm:$0xff]
        %v376 = vld [vmem:[%s251 + $0x228] sm:$0xff]
        %v377 = vld [vmem:[%s251 + $0x230] sm:$0xff]
        %v378 = vld [vmem:[%s251 + $0x238] sm:$0xff]
        %v379 = vld [vmem:[%s251 + $0x240] sm:$0xff]
        %v380 = vld [vmem:[%s251 + $0x248] sm:$0xff]
        %v381 = vld [vmem:[%s251 + $0x250] sm:$0xff]
        %v382 = vld [vmem:[%s251 + $0x258] sm:$0xff]
        %v383 = vld [vmem:[%s251 + $0x260] sm:$0xff]
        %v384 = vld [vmem:[%s251 + $0x268] sm:$0xff]
        %v385 = vld [vmem:[%s251 + $0x270] sm:$0xff]
        %v386 = vld [vmem:[%s251 + $0x278] sm:$0xff]
        %v387 = vld [vmem:[%s251 + $0x280] sm:$0xff]
        %v388 = vld [vmem:[%s251 + $0x288] sm:$0xff]
        %v389 = vld [vmem:[%s251 + $0x290] sm:$0xff]
        %v390 = vld [vmem:[%s251 + $0x298] sm:$0xff]
        %v391 = vld [vmem:[%s251 + $0x2a0] sm:$0xff]
        %v392 = vld [vmem:[%s251 + $0x2a8] sm:$0xff]
        %v393 = vld [vmem:[%s251 + $0x2b0] sm:$0xff]
        %v394 = vld [vmem:[%s251 + $0x2b8] sm:$0xff]
        %v395 = vld [vmem:[%s251 + $0x2c0] sm:$0xff]
        %v396 = vld [vmem:[%s251 + $0x2c8] sm:$0xff]
        %v397 = vld [vmem:[%s251 + $0x2d0] sm:$0xff]
        %v398 = vld [vmem:[%s251 + $0x2d8] sm:$0xff]
        %v399 = vld [vmem:[%s251 + $0x2e0] sm:$0xff]
        %v400 = vld [vmem:[%s251 + $0x2e8] sm:$0xff]
        %v401 = vld [vmem:[%s251 + $0x2f0] sm:$0xff]
        %v402 = vld [vmem:[%s251 + $0x2f8] sm:$0xff]
        %v403 = vld [vmem:[%s261] sm:$0xff]
        %v404 = vld [vmem:[%s261 + $0x8] sm:$0xff]
        %v405 = vld [vmem:[%s261 + $0x10] sm:$0xff]
        %v406 = vld [vmem:[%s261 + $0x18] sm:$0xff]
        %v407 = vld [vmem:[%s261 + $0x20] sm:$0xff]
        %v408 = vld [vmem:[%s261 + $0x28] sm:$0xff]
        %v409 = vld [vmem:[%s261 + $0x30] sm:$0xff]
        %v410 = vld [vmem:[%s261 + $0x38] sm:$0xff]
        %v411 = vld [vmem:[%s261 + $0x40] sm:$0xff]
        %v412 = vld [vmem:[%s261 + $0x48] sm:$0xff]
        %v413 = vld [vmem:[%s261 + $0x50] sm:$0xff]
        %v414 = vld [vmem:[%s261 + $0x58] sm:$0xff]
        %v415 = vld [vmem:[%s261 + $0x60] sm:$0xff]
        %v416 = vld [vmem:[%s261 + $0x68] sm:$0xff]
        %v417 = vld [vmem:[%s261 + $0x70] sm:$0xff]
        %v418 = vld [vmem:[%s261 + $0x78] sm:$0xff]
        %v419 = vld [vmem:[%s261 + $0x80] sm:$0xff]
        %v420 = vld [vmem:[%s261 + $0x88] sm:$0xff]
        %v421 = vld [vmem:[%s261 + $0x90] sm:$0xff]
        %v422 = vld [vmem:[%s261 + $0x98] sm:$0xff]
        %v423 = vld [vmem:[%s261 + $0xa0] sm:$0xff]
        %v424 = vld [vmem:[%s261 + $0xa8] sm:$0xff]
        %v425 = vld [vmem:[%s261 + $0xb0] sm:$0xff]
        %v426 = vld [vmem:[%s261 + $0xb8] sm:$0xff]
        %v427 = vld [vmem:[%s261 + $0xc0] sm:$0xff]
        %v428 = vld [vmem:[%s261 + $0xc8] sm:$0xff]
        %v429 = vld [vmem:[%s261 + $0xd0] sm:$0xff]
        %v430 = vld [vmem:[%s261 + $0xd8] sm:$0xff]
        %v431 = vld [vmem:[%s261 + $0xe0] sm:$0xff]
        %v432 = vld [vmem:[%s261 + $0xe8] sm:$0xff]
        %v433 = vld [vmem:[%s261 + $0xf0] sm:$0xff]
        %v434 = vld [vmem:[%s261 + $0xf8] sm:$0xff]
        %v435 = vld [vmem:[%s261 + $0x100] sm:$0xff]
        %v436 = vld [vmem:[%s261 + $0x108] sm:$0xff]
        %v437 = vld [vmem:[%s261 + $0x110] sm:$0xff]
        %v438 = vld [vmem:[%s261 + $0x118] sm:$0xff]
        %v439 = vld [vmem:[%s261 + $0x120] sm:$0xff]
        %v440 = vld [vmem:[%s261 + $0x128] sm:$0xff]
        %v441 = vld [vmem:[%s261 + $0x130] sm:$0xff]
        %v442 = vld [vmem:[%s261 + $0x138] sm:$0xff]
        %v443 = vld [vmem:[%s261 + $0x140] sm:$0xff]
        %v444 = vld [vmem:[%s261 + $0x148] sm:$0xff]
        %v445 = vld [vmem:[%s261 + $0x150] sm:$0xff]
        %v446 = vld [vmem:[%s261 + $0x158] sm:$0xff]
        %v447 = vld [vmem:[%s261 + $0x160] sm:$0xff]
        %v448 = vld [vmem:[%s261 + $0x168] sm:$0xff]
        %v449 = vld [vmem:[%s261 + $0x170] sm:$0xff]
        %v450 = vld [vmem:[%s261 + $0x178] sm:$0xff]
        %v451 = vld [vmem:[%s261 + $0x180] sm:$0xff]
        %v452 = vld [vmem:[%s261 + $0x188] sm:$0xff]
        %v453 = vld [vmem:[%s261 + $0x190] sm:$0xff]
        %v454 = vld [vmem:[%s261 + $0x198] sm:$0xff]
        %v455 = vld [vmem:[%s261 + $0x1a0] sm:$0xff]
        %v456 = vld [vmem:[%s261 + $0x1a8] sm:$0xff]
        %v457 = vld [vmem:[%s261 + $0x1b0] sm:$0xff]
        %v458 = vld [vmem:[%s261 + $0x1b8] sm:$0xff]
        %v459 = vld [vmem:[%s261 + $0x1c0] sm:$0xff]
        %v460 = vld [vmem:[%s261 + $0x1c8] sm:$0xff]
        %v461 = vld [vmem:[%s261 + $0x1d0] sm:$0xff]
        %v462 = vld [vmem:[%s261 + $0x1d8] sm:$0xff]
        %v463 = vld [vmem:[%s261 + $0x1e0] sm:$0xff]
        %v464 = vld [vmem:[%s261 + $0x1e8] sm:$0xff]
        %v465 = vld [vmem:[%s261 + $0x1f0] sm:$0xff]
        %v466 = vld [vmem:[%s261 + $0x1f8] sm:$0xff]
        %v467 = vld [vmem:[%s261 + $0x200] sm:$0xff]
        %v468 = vld [vmem:[%s261 + $0x208] sm:$0xff]
        %v469 = vld [vmem:[%s261 + $0x210] sm:$0xff]
        %v470 = vld [vmem:[%s261 + $0x218] sm:$0xff]
        %v471 = vld [vmem:[%s261 + $0x220] sm:$0xff]
        %v472 = vld [vmem:[%s261 + $0x228] sm:$0xff]
        %v473 = vld [vmem:[%s261 + $0x230] sm:$0xff]
        %v474 = vld [vmem:[%s261 + $0x238] sm:$0xff]
        %v475 = vld [vmem:[%s261 + $0x240] sm:$0xff]
        %v476 = vld [vmem:[%s261 + $0x248] sm:$0xff]
        %v477 = vld [vmem:[%s261 + $0x250] sm:$0xff]
        %v478 = vld [vmem:[%s261 + $0x258] sm:$0xff]
        %v479 = vld [vmem:[%s261 + $0x260] sm:$0xff]
        %v480 = vld [vmem:[%s261 + $0x268] sm:$0xff]
        %v481 = vld [vmem:[%s261 + $0x270] sm:$0xff]
        %v482 = vld [vmem:[%s261 + $0x278] sm:$0xff]
        %v483 = vld [vmem:[%s261 + $0x280] sm:$0xff]
        %v484 = vld [vmem:[%s261 + $0x288] sm:$0xff]
        %v485 = vld [vmem:[%s261 + $0x290] sm:$0xff]
        %v486 = vld [vmem:[%s261 + $0x298] sm:$0xff]
        %v487 = vld [vmem:[%s261 + $0x2a0] sm:$0xff]
        %v488 = vld [vmem:[%s261 + $0x2a8] sm:$0xff]
        %v489 = vld [vmem:[%s261 + $0x2b0] sm:$0xff]
        %v490 = vld [vmem:[%s261 + $0x2b8] sm:$0xff]
        %v491 = vld [vmem:[%s261 + $0x2c0] sm:$0xff]
        %v492 = vld [vmem:[%s261 + $0x2c8] sm:$0xff]
        %v493 = vld [vmem:[%s261 + $0x2d0] sm:$0xff]
        %v494 = vld [vmem:[%s261 + $0x2d8] sm:$0xff]
        %v495 = vld [vmem:[%s261 + $0x2e0] sm:$0xff]
        %v496 = vld [vmem:[%s261 + $0x2e8] sm:$0xff]
        %v497 = vld [vmem:[%s261 + $0x2f0] sm:$0xff]
        %v498 = vld [vmem:[%s261 + $0x2f8] sm:$0xff]
        %499 = vmatpush.xpose.msra.mxu0 %v322
        %500 = vmatpush.xpose.msra.mxu0 %v321
        %501 = vmatpush.xpose.msra.mxu0 %v320
        %502 = vmatpush.xpose.msra.mxu0 %v319
        %503 = vmatpush.xpose.msra.mxu0 %v318
        %504 = vmatpush.xpose.msra.mxu0 %v317
        %505 = vmatpush.xpose.msra.mxu0 %v316
        %506 = vmatpush.xpose.msra.mxu0 %v315
        %507 = vmatpush.xpose.msra.mxu0 %v314
        %508 = vmatpush.xpose.msra.mxu0 %v313
        %509 = vmatpush.xpose.msra.mxu0 %v312
        %510 = vmatpush.xpose.msra.mxu0 %v311
        %511 = vmatpush.xpose.msra.mxu0 %v310
        %512 = vmatpush.xpose.msra.mxu0 %v309
        %513 = vmatpush.xpose.msra.mxu0 %v308
        %514 = vmatpush.xpose.msra.mxu0 %v307
        %515 = vmatmul.f32.gmra.mxu0 %v301
        %v516 = vpop.f32.mrf.mxu0
        %v517 = vadd.f32 0.0, %v516
        %518 = vmatmul.f32.gmra.mxu0 %v302
        %v519 = vpop.f32.mrf.mxu0
        %v520 = vadd.f32 0.0, %v519
        %521 = vdwg.mxu0
        %522 = vmatpush.xpose.msra.mxu0 %v338
        %523 = vmatpush.xpose.msra.mxu0 %v337
        %524 = vmatpush.xpose.msra.mxu0 %v336
        %525 = vmatpush.xpose.msra.mxu0 %v335
        %526 = vmatpush.xpose.msra.mxu0 %v334
        %527 = vmatpush.xpose.msra.mxu0 %v333
        %528 = vmatpush.xpose.msra.mxu0 %v332
        %529 = vmatpush.xpose.msra.mxu0 %v331
        %530 = vmatpush.xpose.msra.mxu0 %v330
        %531 = vmatpush.xpose.msra.mxu0 %v329
        %532 = vmatpush.xpose.msra.mxu0 %v328
        %533 = vmatpush.xpose.msra.mxu0 %v327
        %534 = vmatpush.xpose.msra.mxu0 %v326
        %535 = vmatpush.xpose.msra.mxu0 %v325
        %536 = vmatpush.xpose.msra.mxu0 %v324
        %537 = vmatpush.xpose.msra.mxu0 %v323
        %538 = vmatmul.f32.gmra.mxu0 %v301
        %v539 = vpop.f32.mrf.mxu0
        %v540 = vadd.f32 0.0, %v539
        %541 = vmatmul.f32.gmra.mxu0 %v302
        %v542 = vpop.f32.mrf.mxu0
        %v543 = vadd.f32 0.0, %v542
        %544 = vdwg.mxu0
        %545 = vmatpush.xpose.msra.mxu0 %v354
        %546 = vmatpush.xpose.msra.mxu0 %v353
        %547 = vmatpush.xpose.msra.mxu0 %v352
        %548 = vmatpush.xpose.msra.mxu0 %v351
        %549 = vmatpush.xpose.msra.mxu0 %v350
        %550 = vmatpush.xpose.msra.mxu0 %v349
        %551 = vmatpush.xpose.msra.mxu0 %v348
        %552 = vmatpush.xpose.msra.mxu0 %v347
        %553 = vmatpush.xpose.msra.mxu0 %v346
        %554 = vmatpush.xpose.msra.mxu0 %v345
        %555 = vmatpush.xpose.msra.mxu0 %v344
        %556 = vmatpush.xpose.msra.mxu0 %v343
        %557 = vmatpush.xpose.msra.mxu0 %v342
        %558 = vmatpush.xpose.msra.mxu0 %v341
        %559 = vmatpush.xpose.msra.mxu0 %v340
        %560 = vmatpush.xpose.msra.mxu0 %v339
        %561 = vmatmul.f32.gmra.mxu0 %v303
        %v562 = vpop.f32.mrf.mxu0
        %v563 = vadd.f32 0.0, %v562
        %564 = vmatmul.f32.gmra.mxu0 %v304
        %v565 = vpop.f32.mrf.mxu0
        %v566 = vadd.f32 0.0, %v565
        %567 = vdwg.mxu0
        %568 = vmatpush.xpose.msra.mxu0 %v370
        %569 = vmatpush.xpose.msra.mxu0 %v369
        %570 = vmatpush.xpose.msra.mxu0 %v368
        %571 = vmatpush.xpose.msra.mxu0 %v367
        %572 = vmatpush.xpose.msra.mxu0 %v366
        %573 = vmatpush.xpose.msra.mxu0 %v365
        %574 = vmatpush.xpose.msra.mxu0 %v364
        %575 = vmatpush.xpose.msra.mxu0 %v363
        %576 = vmatpush.xpose.msra.mxu0 %v362
        %577 = vmatpush.xpose.msra.mxu0 %v361
        %578 = vmatpush.xpose.msra.mxu0 %v360
        %579 = vmatpush.xpose.msra.mxu0 %v359
        %580 = vmatpush.xpose.msra.mxu0 %v358
        %581 = vmatpush.xpose.msra.mxu0 %v357
        %582 = vmatpush.xpose.msra.mxu0 %v356
        %583 = vmatpush.xpose.msra.mxu0 %v355
        %584 = vmatmul.f32.gmra.mxu0 %v303
        %v585 = vpop.f32.mrf.mxu0
        %v586 = vadd.f32 0.0, %v585
        %587 = vmatmul.f32.gmra.mxu0 %v304
        %v588 = vpop.f32.mrf.mxu0
        %v589 = vadd.f32 0.0, %v588
        %590 = vdwg.mxu0
        %591 = vmatpush.xpose.msra.mxu0 %v386
        %592 = vmatpush.xpose.msra.mxu0 %v385
        %593 = vmatpush.xpose.msra.mxu0 %v384
        %594 = vmatpush.xpose.msra.mxu0 %v383
        %595 = vmatpush.xpose.msra.mxu0 %v382
        %596 = vmatpush.xpose.msra.mxu0 %v381
        %597 = vmatpush.xpose.msra.mxu0 %v380
        %598 = vmatpush.xpose.msra.mxu0 %v379
        %599 = vmatpush.xpose.msra.mxu0 %v378
        %600 = vmatpush.xpose.msra.mxu0 %v377
        %601 = vmatpush.xpose.msra.mxu0 %v376
        %602 = vmatpush.xpose.msra.mxu0 %v375
        %603 = vmatpush.xpose.msra.mxu0 %v374
        %604 = vmatpush.xpose.msra.mxu0 %v373
        %605 = vmatpush.xpose.msra.mxu0 %v372
        %606 = vmatpush.xpose.msra.mxu0 %v371
        %607 = vmatmul.f32.gmra.mxu0 %v305
        %v608 = vpop.f32.mrf.mxu0
        %v609 = vadd.f32 0.0, %v608
        %610 = vmatmul.f32.gmra.mxu0 %v306
        %v611 = vpop.f32.mrf.mxu0
        %v612 = vadd.f32 0.0, %v611
        %613 = vdwg.mxu0
        %614 = vmatpush.xpose.msra.mxu0 %v402
        %615 = vmatpush.xpose.msra.mxu0 %v401
        %616 = vmatpush.xpose.msra.mxu0 %v400
        %617 = vmatpush.xpose.msra.mxu0 %v399
        %618 = vmatpush.xpose.msra.mxu0 %v398
        %619 = vmatpush.xpose.msra.mxu0 %v397
        %620 = vmatpush.xpose.msra.mxu0 %v396
        %621 = vmatpush.xpose.msra.mxu0 %v395
        %622 = vmatpush.xpose.msra.mxu0 %v394
        %623 = vmatpush.xpose.msra.mxu0 %v393
        %624 = vmatpush.xpose.msra.mxu0 %v392
        %625 = vmatpush.xpose.msra.mxu0 %v391
        %626 = vmatpush.xpose.msra.mxu0 %v390
        %627 = vmatpush.xpose.msra.mxu0 %v389
        %628 = vmatpush.xpose.msra.mxu0 %v388
        %629 = vmatpush.xpose.msra.mxu0 %v387
        %630 = vmatmul.f32.gmra.mxu0 %v305
        %v631 = vpop.f32.mrf.mxu0
        %v632 = vadd.f32 0.0, %v631
        %633 = vmatmul.f32.gmra.mxu0 %v306
        %v634 = vpop.f32.mrf.mxu0
        %v635 = vadd.f32 0.0, %v634
        %636 = vdwg.mxu0
        %v637 = vmax.f32 %v517, %v520
        %v638 = vrot.slane %v637, 4
        %v639 = vmax.f32 %v637, %v638
        %v640 = vrot.slane %v639, 2
        %v641 = vmax.f32 %v639, %v640
        %v642 = vrot.slane %v641, 1
        %v643 = vmax.f32 %v641, %v642
        %v644 = vmax.f32 %v540, %v543
        %v645 = vrot.slane %v644, 4
        %v646 = vmax.f32 %v644, %v645
        %v647 = vrot.slane %v646, 2
        %v648 = vmax.f32 %v646, %v647
        %v649 = vrot.slane %v648, 1
        %v650 = vmax.f32 %v648, %v649
        %v651 = vmax.f32 %v563, %v566
        %v652 = vrot.slane %v651, 4
        %v653 = vmax.f32 %v651, %v652
        %v654 = vrot.slane %v653, 2
        %v655 = vmax.f32 %v653, %v654
        %v656 = vrot.slane %v655, 1
        %v657 = vmax.f32 %v655, %v656
        %v658 = vmax.f32 %v586, %v589
        %v659 = vrot.slane %v658, 4
        %v660 = vmax.f32 %v658, %v659
        %v661 = vrot.slane %v660, 2
        %v662 = vmax.f32 %v660, %v661
        %v663 = vrot.slane %v662, 1
        %v664 = vmax.f32 %v662, %v663
        %v665 = vmax.f32 %v609, %v612
        %v666 = vrot.slane %v665, 4
        %v667 = vmax.f32 %v665, %v666
        %v668 = vrot.slane %v667, 2
        %v669 = vmax.f32 %v667, %v668
        %v670 = vrot.slane %v669, 1
        %v671 = vmax.f32 %v669, %v670
        %v672 = vmax.f32 %v632, %v635
        %v673 = vrot.slane %v672, 4
        %v674 = vmax.f32 %v672, %v673
        %v675 = vrot.slane %v674, 2
        %v676 = vmax.f32 %v674, %v675
        %v677 = vrot.slane %v676, 1
        %v678 = vmax.f32 %v676, %v677
        %v679 = vsub.f32 %v517, %v643
        %v680 = vsub.f32 %v540, %v650
        %v681 = vsub.f32 %v520, %v643
        %v682 = vsub.f32 %v543, %v650
        %v683 = vsub.f32 %v563, %v657
        %v684 = vsub.f32 %v586, %v664
        %v685 = vsub.f32 %v566, %v657
        %v686 = vsub.f32 %v589, %v664
        %v687 = vsub.f32 %v609, %v671
        %v688 = vsub.f32 %v632, %v678
        %v689 = vsub.f32 %v612, %v671
        %v690 = vsub.f32 %v635, %v678
        %v691 = vmul.f32 %v679, 1.442695
        %v692 = vpow.pop %v691
        %v693 = vmul.f32 %v680, 1.442695
        %v694 = vpow.pop %v693
        %v695 = vmul.f32 %v681, 1.442695
        %v696 = vpow.pop %v695
        %v697 = vmul.f32 %v682, 1.442695
        %v698 = vpow.pop %v697
        %v699 = vmul.f32 %v683, 1.442695
        %v700 = vpow.pop %v699
        %v701 = vmul.f32 %v684, 1.442695
        %v702 = vpow.pop %v701
        %v703 = vmul.f32 %v685, 1.442695
        %v704 = vpow.pop %v703
        %v705 = vmul.f32 %v686, 1.442695
        %v706 = vpow.pop %v705
        %v707 = vmul.f32 %v687, 1.442695
        %v708 = vpow.pop %v707
        %v709 = vmul.f32 %v688, 1.442695
        %v710 = vpow.pop %v709
        %v711 = vmul.f32 %v689, 1.442695
        %v712 = vpow.pop %v711
        %v713 = vmul.f32 %v690, 1.442695
        %v714 = vpow.pop %v713
        %v715 = vadd.f32 %v692, %v696
        %v716 = vrot.slane %v715, 4
        %v717 = vadd.f32 %v715, %v716
        %v718 = vrot.slane %v717, 2
        %v719 = vadd.f32 %v717, %v718
        %v720 = vrot.slane %v719, 1
        %v721 = vadd.f32 %v719, %v720
        %v722 = vadd.f32 %v694, %v698
        %v723 = vrot.slane %v722, 4
        %v724 = vadd.f32 %v722, %v723
        %v725 = vrot.slane %v724, 2
        %v726 = vadd.f32 %v724, %v725
        %v727 = vrot.slane %v726, 1
        %v728 = vadd.f32 %v726, %v727
        %v729 = vadd.f32 %v700, %v704
        %v730 = vrot.slane %v729, 4
        %v731 = vadd.f32 %v729, %v730
        %v732 = vrot.slane %v731, 2
        %v733 = vadd.f32 %v731, %v732
        %v734 = vrot.slane %v733, 1
        %v735 = vadd.f32 %v733, %v734
        %v736 = vadd.f32 %v702, %v706
        %v737 = vrot.slane %v736, 4
        %v738 = vadd.f32 %v736, %v737
        %v739 = vrot.slane %v738, 2
        %v740 = vadd.f32 %v738, %v739
        %v741 = vrot.slane %v740, 1
        %v742 = vadd.f32 %v740, %v741
        %v743 = vadd.f32 %v708, %v712
        %v744 = vrot.slane %v743, 4
        %v745 = vadd.f32 %v743, %v744
        %v746 = vrot.slane %v745, 2
        %v747 = vadd.f32 %v745, %v746
        %v748 = vrot.slane %v747, 1
        %v749 = vadd.f32 %v747, %v748
        %v750 = vadd.f32 %v710, %v714
        %v751 = vrot.slane %v750, 4
        %v752 = vadd.f32 %v750, %v751
        %v753 = vrot.slane %v752, 2
        %v754 = vadd.f32 %v752, %v753
        %v755 = vrot.slane %v754, 1
        %v756 = vadd.f32 %v754, %v755
        %v757 = vrcp.pop %v721
        %v758 = vrcp.pop %v728
        %v759 = vrcp.pop %v735
        %v760 = vrcp.pop %v742
        %v761 = vrcp.pop %v749
        %v762 = vrcp.pop %v756
        %v763 = vmul.f32 %v692, %v757
        %v764 = vmul.f32 %v694, %v758
        %v765 = vmul.f32 %v696, %v757
        %v766 = vmul.f32 %v698, %v758
        %v767 = vmul.f32 %v700, %v759
        %v768 = vmul.f32 %v702, %v760
        %v769 = vmul.f32 %v704, %v759
        %v770 = vmul.f32 %v706, %v760
        %v771 = vmul.f32 %v708, %v761
        %v772 = vmul.f32 %v710, %v762
        %v773 = vmul.f32 %v712, %v761
        %v774 = vmul.f32 %v714, %v762
        %775 = vmatpush.msra.mxu0 %v418
        %776 = vmatpush.msra.mxu0 %v417
        %777 = vmatpush.msra.mxu0 %v416
        %778 = vmatpush.msra.mxu0 %v415
        %779 = vmatpush.msra.mxu0 %v414
        %780 = vmatpush.msra.mxu0 %v413
        %781 = vmatpush.msra.mxu0 %v412
        %782 = vmatpush.msra.mxu0 %v411
        %783 = vmatpush.msra.mxu0 %v410
        %784 = vmatpush.msra.mxu0 %v409
        %785 = vmatpush.msra.mxu0 %v408
        %786 = vmatpush.msra.mxu0 %v407
        %787 = vmatpush.msra.mxu0 %v406
        %788 = vmatpush.msra.mxu0 %v405
        %789 = vmatpush.msra.mxu0 %v404
        %790 = vmatpush.msra.mxu0 %v403
        %791 = vmatmul.f32.gmra.mxu0 %v763
        %v792 = vpop.f32.mrf.mxu0
        %v793 = vadd.f32 0.0, %v792
        %794 = vmatmul.f32.gmra.mxu0 %v765
        %v795 = vpop.f32.mrf.mxu0
        %v796 = vadd.f32 0.0, %v795
        %797 = vdwg.mxu0
        %798 = vmatpush.msra.mxu0 %v434
        %799 = vmatpush.msra.mxu0 %v433
        %800 = vmatpush.msra.mxu0 %v432
        %801 = vmatpush.msra.mxu0 %v431
        %802 = vmatpush.msra.mxu0 %v430
        %803 = vmatpush.msra.mxu0 %v429
        %804 = vmatpush.msra.mxu0 %v428
        %805 = vmatpush.msra.mxu0 %v427
        %806 = vmatpush.msra.mxu0 %v426
        %807 = vmatpush.msra.mxu0 %v425
        %808 = vmatpush.msra.mxu0 %v424
        %809 = vmatpush.msra.mxu0 %v423
        %810 = vmatpush.msra.mxu0 %v422
        %811 = vmatpush.msra.mxu0 %v421
        %812 = vmatpush.msra.mxu0 %v420
        %813 = vmatpush.msra.mxu0 %v419
        %814 = vmatmul.f32.gmra.mxu0 %v764
        %v815 = vpop.f32.mrf.mxu0
        %v816 = vadd.f32 %v793, %v815
        %817 = vmatmul.f32.gmra.mxu0 %v766
        %v818 = vpop.f32.mrf.mxu0
        %v819 = vadd.f32 %v796, %v818
        %820 = vdwg.mxu0
        %821 = vmatpush.msra.mxu0 %v450
        %822 = vmatpush.msra.mxu0 %v449
        %823 = vmatpush.msra.mxu0 %v448
        %824 = vmatpush.msra.mxu0 %v447
        %825 = vmatpush.msra.mxu0 %v446
        %826 = vmatpush.msra.mxu0 %v445
        %827 = vmatpush.msra.mxu0 %v444
        %828 = vmatpush.msra.mxu0 %v443
        %829 = vmatpush.msra.mxu0 %v442
        %830 = vmatpush.msra.mxu0 %v441
        %831 = vmatpush.msra.mxu0 %v440
        %832 = vmatpush.msra.mxu0 %v439
        %833 = vmatpush.msra.mxu0 %v438
        %834 = vmatpush.msra.mxu0 %v437
        %835 = vmatpush.msra.mxu0 %v436
        %836 = vmatpush.msra.mxu0 %v435
        %837 = vmatmul.f32.gmra.mxu0 %v767
        %v838 = vpop.f32.mrf.mxu0
        %v839 = vadd.f32 0.0, %v838
        %840 = vmatmul.f32.gmra.mxu0 %v769
        %v841 = vpop.f32.mrf.mxu0
        %v842 = vadd.f32 0.0, %v841
        %843 = vdwg.mxu0
        %844 = vmatpush.msra.mxu0 %v466
        %845 = vmatpush.msra.mxu0 %v465
        %846 = vmatpush.msra.mxu0 %v464
        %847 = vmatpush.msra.mxu0 %v463
        %848 = vmatpush.msra.mxu0 %v462
        %849 = vmatpush.msra.mxu0 %v461
        %850 = vmatpush.msra.mxu0 %v460
        %851 = vmatpush.msra.mxu0 %v459
        %852 = vmatpush.msra.mxu0 %v458
        %853 = vmatpush.msra.mxu0 %v457
        %854 = vmatpush.msra.mxu0 %v456
        %855 = vmatpush.msra.mxu0 %v455
        %856 = vmatpush.msra.mxu0 %v454
        %857 = vmatpush.msra.mxu0 %v453
        %858 = vmatpush.msra.mxu0 %v452
        %859 = vmatpush.msra.mxu0 %v451
        %860 = vmatmul.f32.gmra.mxu0 %v768
        %v861 = vpop.f32.mrf.mxu0
        %v862 = vadd.f32 %v839, %v861
        %863 = vmatmul.f32.gmra.mxu0 %v770
        %v864 = vpop.f32.mrf.mxu0
        %v865 = vadd.f32 %v842, %v864
        %866 = vdwg.mxu0
        %867 = vmatpush.msra.mxu0 %v482
        %868 = vmatpush.msra.mxu0 %v481
        %869 = vmatpush.msra.mxu0 %v480
        %870 = vmatpush.msra.mxu0 %v479
        %871 = vmatpush.msra.mxu0 %v478
        %872 = vmatpush.msra.mxu0 %v477
        %873 = vmatpush.msra.mxu0 %v476
        %874 = vmatpush.msra.mxu0 %v475
        %875 = vmatpush.msra.mxu0 %v474
        %876 = vmatpush.msra.mxu0 %v473
        %877 = vmatpush.msra.mxu0 %v472
        %878 = vmatpush.msra.mxu0 %v471
        %879 = vmatpush.msra.mxu0 %v470
        %880 = vmatpush.msra.mxu0 %v469
        %881 = vmatpush.msra.mxu0 %v468
        %882 = vmatpush.msra.mxu0 %v467
        %883 = vmatmul.f32.gmra.mxu0 %v771
        %v884 = vpop.f32.mrf.mxu0
        %v885 = vadd.f32 0.0, %v884
        %886 = vmatmul.f32.gmra.mxu0 %v773
        %v887 = vpop.f32.mrf.mxu0
        %v888 = vadd.f32 0.0, %v887
        %889 = vdwg.mxu0
        %890 = vmatpush.msra.mxu0 %v498
        %891 = vmatpush.msra.mxu0 %v497
        %892 = vmatpush.msra.mxu0 %v496
        %893 = vmatpush.msra.mxu0 %v495
        %894 = vmatpush.msra.mxu0 %v494
        %895 = vmatpush.msra.mxu0 %v493
        %896 = vmatpush.msra.mxu0 %v492
        %897 = vmatpush.msra.mxu0 %v491
        %898 = vmatpush.msra.mxu0 %v490
        %899 = vmatpush.msra.mxu0 %v489
        %900 = vmatpush.msra.mxu0 %v488
        %901 = vmatpush.msra.mxu0 %v487
        %902 = vmatpush.msra.mxu0 %v486
        %903 = vmatpush.msra.mxu0 %v485
        %904 = vmatpush.msra.mxu0 %v484
        %905 = vmatpush.msra.mxu0 %v483
        %906 = vmatmul.f32.gmra.mxu0 %v772
        %v907 = vpop.f32.mrf.mxu0
        %v908 = vadd.f32 %v885, %v907
        %909 = vmatmul.f32.gmra.mxu0 %v774
        %v910 = vpop.f32.mrf.mxu0
        %v911 = vadd.f32 %v888, %v910
        %912 = vdwg.mxu0
        %913 = vst [vmem:[%s294] sm:$0xff] %v816
        %914 = vst [vmem:[%s294 + $0x8] sm:$0xff] %v819
        %915 = vst [vmem:[%s294 + $0x10] sm:$0xff] %v862
        %916 = vst [vmem:[%s294 + $0x18] sm:$0xff] %v865
        %917 = vst [vmem:[%s294 + $0x20] sm:$0xff] %v908
        %918 = vst [vmem:[%s294 + $0x28] sm:$0xff] %v911
        %s919 = sand.u32 %s125, 1
        %s920 = scalar_lea.sflag [#allocation4], %s919
        %s921 = sand.u32 %s125, 1
        %s922 = smul.addr %s921, 48
        %s923 = scalar_lea.vmem [#allocation8], %s922
        // Predicated region
        $region45: #{tpu_custom_call.1} parent=31 // pred_check
          %p924 = pneg %p135
        $region46: #{tpu_custom_call.1} parent=31 // pred_check_branch
          %926 = sbr.rel (%p924) target = $region48
        $region47: #{tpu_custom_call.1} parent=31 // pred_region
          %s927 = smul.u32 3, %s27
          %929 = vsyncadd %s920, 0
          %s930 = smul.addr %s927, 2
          %s931 = smul.addr %s930, 8
          %s932 = scalar_lea.hbm %s3, %s931
          %s933 = sshll.u32 %s923, 4
          %s934 = int_to_ptr.vmem [resolvable:$true] %s933
          %s935 = sshll.u32 %s932, 4
          %s936 = int_to_ptr.hbm [resolvable:$true] %s935
          %941 = dma.vmem_to_hbm [thread:$0]  %s934, 768, %s936, %s920, 128, 128, 8
        $region48: #{tpu_custom_call.1} parent=31 // pred_fallthru
          _
      $region32: #{tpu_custom_call.1} parent=5 // pred_fallthru
        _
      %p942 = scmp.le.s32.totalorder 2, %s18
      // Predicated region
      $region49: #{tpu_custom_call.1} parent=5 // pred_check
        %p943 = pneg %p942
      $region50: #{tpu_custom_call.1} parent=5 // pred_check_branch
        %945 = sbr.rel (%p943) target = $region52
      $region51: #{tpu_custom_call.1} parent=5 // pred_region
        %s946 = ssub.s32 %s18, 2
        // Predicated region
        $region53: #{tpu_custom_call.1} parent=51 // pred_check
          %p947 = pneg %p141
        $region54: #{tpu_custom_call.1} parent=51 // pred_check_branch
          %949 = sbr.rel (%p947) target = $region56
        $region55: #{tpu_custom_call.1} parent=51 // pred_region
          %s950 = sand.u32 %s126, 1
          %s951 = scalar_lea.sflag [#allocation4], %s950
          %s952 = sand.u32 %s126, 1
          %s953 = smul.addr %s952, 48
          %s954 = scalar_lea.vmem [#allocation8], %s953
          %956 = dma.done %s951, 768
        $region56: #{tpu_custom_call.1} parent=51 // pred_fallthru
          _
      $region52: #{tpu_custom_call.1} parent=5 // pred_fallthru
        _
    $region6: #{tpu_custom_call.1} parent=1 // loop_footer
      %s22 = sadd.s32 1, %s18
    $region7: #{tpu_custom_call.1} parent=1 // loop_footer_branch
      %17 = sbr.rel target = $region3
    $region8: #{tpu_custom_call.1} parent=1 // loop_exit
      _
    %957 = vsyncpa [#allocation3], 1
    %s958 = scalar_lea.sflag [#allocation3], 1
    %959 = vsyncpa %s958, 1
    %960 = vsyncpa [#allocation6], 1
    %s961 = scalar_lea.sflag [#allocation6], 1
    %962 = vsyncpa %s961, 1
    %963 = vsyncpa [#allocation4], 1
    %s964 = scalar_lea.sflag [#allocation4], 1
    %965 = vsyncpa %s964, 1

</llo_original>
